<compile_context>
chip_gen: v7x
topology: tpu7x:2x2x1
jax: 0.10.0
libtpu: 0.0.40
codegen_flags: <defaults>
</compile_context>

<pallas_src>
import functools

import jax
import jax.numpy as jnp
from jax.experimental import pallas as pl
from jax.experimental.pallas import tpu as pltpu


# --------------------------- VMEM budget / tile helpers ---------------------------

def _round_up(x, m):
    return ((x + m - 1) // m) * m


def _vmem_budget_limit():
    """Generation-aware working-set budget and scoped-VMEM limit."""
    try:
        cap = int(getattr(pltpu.get_tpu_info(), "vmem_capacity_bytes",
                          64 * 1024 * 1024))
    except Exception:  # no TPU info available -> be conservative
        cap = 64 * 1024 * 1024
    if cap >= 100 * 1024 * 1024:          # v5e / v6e: 128 MiB physical VMEM
        return 96 * 1024 * 1024, 110 * 1024 * 1024
    return 40 * 1024 * 1024, 48 * 1024 * 1024   # v7x: 64 MiB physical VMEM


def _largest_divisor_tile(n, target):
    """Largest multiple of 8 that divides n and is <= target (else n)."""
    if n <= target:
        return n
    tm = (int(target) // 8) * 8
    while tm >= 8:
        if n % tm == 0:
            return tm
        tm -= 8
    return n


def _pick_tile_rows(n, num_heads, d, out_w, use_res_attn, emit_attn, budget,
                    tile_rows=None, gran=16):
    """Pick dst-tile height (multiple of 16 rows: bf16 attn sublane packing)."""
    nl = _round_up(n, 128)
    if tile_rows is None:
        # per-dst-row streamed bytes, x2 for double buffering
        per_row = 2 * (4 * nl                                   # edge code (int32)
                       + 4 * 128                                # er ([TM,H] lane-padded)
                       + 4 * out_w                              # rst out (f32)
                       + (2 * num_heads * nl if use_res_attn else 0)   # res_attn (bf16)
                       + (2 * num_heads * nl if emit_attn else 0))     # attn out (bf16)
        per_row += 8 * 4 * nl                                   # in-kernel f32 temporaries
        # grid-invariant blocks (feat [N, H*D] lane-dense, el [H, N]), x2 buffers.
        # TODO(synk): v7x large-N escape hatch: src-axis online-softmax tiling or
        # single-buffered invariants when `fixed` approaches the 64 MiB VMEM.
        fixed = 2 * 4 * (n * _round_up(num_heads * d, 128) + 8 * nl)
        tile_rows = max(gran, (budget - fixed) // max(per_row, 1))
    tm = max(gran, (int(tile_rows) // gran) * gran)
    tm = min(tm, _round_up(n, gran))
    n_pad = ((n + tm - 1) // tm) * tm     # graceful dst-axis padding for awkward N
    return tm, n_pad


# ----------------------- fused feature-transform Pallas kernel -----------------------

def _transform_kernel(x_ref, w_ref, alr_ref, ft_ref, elr_ref):
    # ft = x @ W ; one fused [tb, hd] @ [hd, 2H] matmul for attn_l AND attn_r.
    ft = jnp.dot(x_ref[...], w_ref[...], preferred_element_type=jnp.float32)
    ft_ref[...] = ft
    elr_ref[...] = jnp.dot(ft, alr_ref[...], preferred_element_type=jnp.float32)


def fused_transform(x, w, attn_l, attn_r, vmem_limit):
    """One pallas_call: feat = x @ W plus both attention reductions (el | er)."""
    n, f_in = x.shape
    num_heads, d = attn_l.shape
    hd = num_heads * d

    # Block-diagonal matrices so el / er become one matmul on the in-VMEM ft.
    eye = jnp.eye(num_heads, dtype=jnp.float32)
    al = jnp.einsum("hd,hg->hdg", attn_l.astype(jnp.float32), eye).reshape(hd, num_heads)
    ar = jnp.einsum("hd,hg->hdg", attn_r.astype(jnp.float32), eye).reshape(hd, num_heads)
    alr = jnp.concatenate([al, ar], axis=1)                       # [hd, 2H]

    tb = _largest_divisor_tile(n, 256)

    ft, elr = pl.pallas_call(
        _transform_kernel,
        out_shape=(jax.ShapeDtypeStruct((n, hd), jnp.float32),
                   jax.ShapeDtypeStruct((n, 2 * num_heads), jnp.float32)),
        grid=(n // tb,),
        in_specs=[pl.BlockSpec((tb, f_in), lambda i: (i, 0)),
                  pl.BlockSpec((f_in, hd), lambda i: (0, 0)),
                  pl.BlockSpec((hd, 2 * num_heads), lambda i: (0, 0))],
        out_specs=(pl.BlockSpec((tb, hd), lambda i: (i, 0)),
                   pl.BlockSpec((tb, 2 * num_heads), lambda i: (i, 0))),
        compiler_params=pltpu.CompilerParams(
            dimension_semantics=("parallel",),
            vmem_limit_bytes=vmem_limit),
    )(x.astype(jnp.float32), w.astype(jnp.float32), alr)
    return ft, elr[:, :num_heads], elr[:, num_heads:]


# ------------------------------ GAT attention kernel ------------------------------

def _gat_tile_kernel(ee_tab_ref, feat_ref, el_ref, er_ref, code_ref, *rest,
                     num_heads, d, num_etypes, negative_slope, alpha,
                     use_res_attn, emit_attn, agg_bf16):
    """One destination-row tile, all heads.

    Refs:
      ee_tab_ref : SMEM [num_etypes, H] f32   edge-type attention score table
      feat_ref   : VMEM [N, H*D] f32          transformed src features (grid-invariant)
      el_ref     : VMEM [H, N] f32            attn_l score per source (grid-invariant)
      er_ref     : VMEM [TM, H] f32           attn_r score for this dst tile
      code_ref   : VMEM [TM, N] int32         etype on edges, num_etypes off-edges
      rest       : [res_attn (H,TM,N) bf16]? , rst (TM, out_w) f32 , [attn (H,TM,N) bf16]?
    """
    idx = 0
    res_ref = None
    if use_res_attn:
        res_ref = rest[idx]
        idx += 1
    rst_ref = rest[idx]
    idx += 1
    attn_ref = rest[idx] if emit_attn else None

    # ---- per-tile work shared by all heads (hoisted out of the head loop) ----
    code = code_ref[...]                                       # [TM, N] int32
    is_edge = code < num_etypes
    neg = jnp.where(is_edge, 0.0, -1e30)                       # additive softmax mask
    row_has_edge = jnp.max(jnp.where(is_edge, 1.0, 0.0),
                           axis=1, keepdims=True)              # [TM, 1] (XLU reduce)
    et_masks = [code == t for t in range(num_etypes)]          # hoisted compares

    hd = num_heads * d
    if rst_ref.shape[-1] > hd:                                 # zero lane-padding once
        rst_ref[...] = jnp.zeros(rst_ref.shape, jnp.float32)

    # TODO(synk): for configs with many heads (>~4) switch this static unroll to a
    # lax.fori_loop with pl.ds head indexing to bound vreg live ranges.
    for h in range(num_heads):
        el = el_ref[h:h + 1, :]                                # [1, N]  (broadcast over dst)
        er = er_ref[:, h:h + 1]                                # [TM, 1] (broadcast over src)

        # edge-type score gather from the tiny SMEM table (selects only, per head)
        ee = jnp.zeros(code.shape, jnp.float32)
        for t in range(num_etypes):
            ee = jnp.where(et_masks[t], ee_tab_ref[t, h], ee)

        e = el + er + ee                                       # e[dst, src]
        e = jnp.maximum(e, negative_slope * e)                 # LeakyReLU (1 VALU op)
        e = e + neg                                            # mask non-edges
        m = jnp.max(e, axis=1, keepdims=True)
        p = jnp.exp(e - m)                                     # off-edges underflow to 0
        s = jnp.sum(p, axis=1, keepdims=True)
        # approx reciprocal on EUP; row_has_edge zeroes isolated (and padded) rows
        inv = pl.reciprocal(jnp.maximum(s, 1e-20), approx=True) * row_has_edge

        feat_h = feat_ref[:, h * d:(h + 1) * d]                # [N, D] static lane slice

        if use_res_attn:
            a = (p * inv) * (1.0 - alpha) + res_ref[h, :, :].astype(jnp.float32) * alpha
            lhs = a
        elif emit_attn:
            a = p * inv
            lhs = a
        else:
            a = None
            lhs = p                                            # normalize after aggregation

        if agg_bf16:   # opt-in: bf16-native MXU on v6e/v7x (small numerics tradeoff)
            rst_h = jnp.dot(lhs.astype(jnp.bfloat16), feat_h.astype(jnp.bfloat16),
                            preferred_element_type=jnp.float32)
        else:
            rst_h = jnp.dot(lhs, feat_h, preferred_element_type=jnp.float32)
        if a is None:
            rst_h = rst_h * inv

        if emit_attn:
            attn_ref[h, :, :] = a.astype(attn_ref.dtype)
        rst_ref[:, h * d:(h + 1) * d] = rst_h                  # direct per-head write


def gat_attention(ee_tab, feat, el, er, edge_code, res_attn, *, num_heads, d,
                  negative_slope, alpha, emit_attn, tile_rows, agg_bf16,
                  attn_dtype, vmem_budget, vmem_limit):
    """Masked edge-softmax + aggregation for all heads, tiled over dst rows."""
    n = feat.shape[0]
    hd = num_heads * d
    num_etypes = ee_tab.shape[0]
    use_res_attn = res_attn is not None
    out_w = _round_up(max(hd, 128), 128)                       # lane-dense output slab

    tm, n_pad = _pick_tile_rows(n, num_heads, d, out_w, use_res_attn, emit_attn,
                                vmem_budget, tile_rows)

    code = edge_code.astype(jnp.int32)
    er_p = er.astype(jnp.float32)
    res_p = res_attn
    if n_pad != n:                                             # pad dst axis gracefully
        pad = n_pad - n
        code = jnp.pad(code, ((0, pad), (0, 0)), constant_values=num_etypes)
        er_p = jnp.pad(er_p, ((0, pad), (0, 0)))
        if use_res_attn:
            res_p = jnp.pad(res_p, ((0, 0), (0, pad), (0, 0)))

    kernel = functools.partial(
        _gat_tile_kernel,
        num_heads=int(num_heads), d=int(d), num_etypes=int(num_etypes),
        negative_slope=float(negative_slope), alpha=float(alpha),
        use_res_attn=use_res_attn, emit_attn=emit_attn, agg_bf16=bool(agg_bf16))

    in_specs = [
        pl.BlockSpec(memory_space=pltpu.MemorySpace.SMEM),       # ee table (tiny)
        pl.BlockSpec((n, hd), lambda i: (0, 0)),                 # feat  [N, H*D] (invariant)
        pl.BlockSpec((num_heads, n), lambda i: (0, 0)),          # el    [H, N]   (invariant)
        pl.BlockSpec((tm, num_heads), lambda i: (i, 0)),         # er    per dst tile
        pl.BlockSpec((tm, n), lambda i: (i, 0)),                 # edge code (int32)
    ]
    operands = [ee_tab.astype(jnp.float32), feat.astype(jnp.float32),
                el.astype(jnp.float32), er_p, code]
    if use_res_attn:
        in_specs.append(pl.BlockSpec((num_heads, tm, n), lambda i: (0, i, 0)))
        operands.append(res_p.astype(attn_dtype))

    out_shapes = [jax.ShapeDtypeStruct((n_pad, out_w), jnp.float32)]
    out_specs = [pl.BlockSpec((tm, out_w), lambda i: (i, 0))]    # lane-dense slab
    if emit_attn:
        out_shapes.append(jax.ShapeDtypeStruct((num_heads, n_pad, n), attn_dtype))
        out_specs.append(pl.BlockSpec((num_heads, tm, n), lambda i: (0, i, 0)))

    outs = pl.pallas_call(
        kernel,
        out_shape=tuple(out_shapes),
        grid=(n_pad // tm,),
        in_specs=in_specs,
        out_specs=tuple(out_specs),
        compiler_params=pltpu.CompilerParams(
            dimension_semantics=("parallel",),     # dst tiles feed both v7x TCs
            vmem_limit_bytes=vmem_limit),
    )(*operands)

    rst = outs[0][:n, :hd]
    attn = outs[1][:, :n, :] if emit_attn else None
    return rst, attn


# ------------------------------ myGATConv (dense) ------------------------------

def gat_conv(lp, h, edge_code, res_attn, *, negative_slope, alpha,
             apply_activation, emit_attn, tile_rows, agg_bf16, attn_dtype,
             vmem_budget, vmem_limit):
    """Dense equivalent of myGATConv.forward(g, h, e_feat, res_attn); flat [N, H*D] out."""
    n = h.shape[0]
    num_heads, d = lp["heads"], lp["out_feats"]

    # fused fc (bias=False) + attn_l / attn_r reductions — one Pallas launch
    ft, el_n, er_n = fused_transform(h, lp["W"], lp["attn_l"], lp["attn_r"], vmem_limit)
    el_t = jnp.transpose(el_n)                                  # [H, N] lane-dense rows

    # edge-type attention scores: tiny [num_etypes, H] table, gathered in-kernel
    fe = (lp["edge_emb"] @ lp["W_e"]).reshape(-1, num_heads, lp["edge_dim"])
    ee_tab = jnp.sum(fe * lp["attn_e"][None], axis=-1)          # [num_etypes, H]

    rst, attn = gat_attention(ee_tab, ft, el_t, er_n, edge_code, res_attn,
                              num_heads=num_heads, d=d,
                              negative_slope=negative_slope, alpha=alpha,
                              emit_attn=emit_attn, tile_rows=tile_rows,
                              agg_bf16=agg_bf16, attn_dtype=attn_dtype,
                              vmem_budget=vmem_budget, vmem_limit=vmem_limit)

    if lp["residual"]:
        if lp.get("W_res") is not None:
            resval = h @ lp["W_res"]        # tiny projection: left to XLA
        else:
            resval = h                      # Identity res_fc
        rst = rst + resval.reshape(n, num_heads * d)

    if apply_activation:
        rst = jax.nn.elu(rst)               # F.elu
    return rst, attn


# ------------------------------- myGAT1 forward --------------------------------

def mygat1_forward(params, features_list, adj, etype, cfg):
    budget, limit = _vmem_budget_limit()
    num_etypes = cfg["num_etypes"]
    attn_dtype = (jnp.bfloat16 if cfg.get("attn_dtype", "bfloat16") == "bfloat16"
                  else jnp.float32)

    # pack adjacency + edge-type into ONE int32 stream (num_etypes == "no edge")
    edge_code = jnp.where(adj > 0, etype.astype(jnp.int32), jnp.int32(num_etypes))

    # Per-node-type input projection + residual relu concat: tiny ragged matmuls,
    # left to XLA (pallas_call launch overhead dominates at these sizes).
    h_parts = []
    for (w, b), feat in zip(params["fc_list"], features_list):
        temp = feat.astype(jnp.float32) @ w + b
        res = temp @ params["fc_res_w"] + params["fc_res_b"]
        h_parts.append(jnp.concatenate([jax.nn.relu(res), jax.nn.relu(temp)], axis=1))
    h = jnp.concatenate(h_parts, axis=0)                       # [N, 2*num_hidden]

    kw = dict(negative_slope=cfg["negative_slope"], alpha=cfg["alpha"],
              tile_rows=cfg.get("tile_rows"), agg_bf16=cfg.get("agg_bf16", False),
              attn_dtype=attn_dtype, vmem_budget=budget, vmem_limit=limit)

    res_attn = None
    for l in range(cfg["num_layers"]):
        # the last hidden layer's attention is never consumed -> skip emitting it
        emit = (l + 1) < cfg["num_layers"]
        h, res_attn = gat_conv(params["layers"][l], h, edge_code, res_attn,
                               apply_activation=True, emit_attn=emit, **kw)

    out_lp = params["layers"][-1]
    logits, _ = gat_conv(out_lp, h, edge_code, None,
                         apply_activation=False, emit_attn=False, **kw)
    logits = logits.reshape(-1, out_lp["heads"], out_lp["out_feats"]).mean(axis=1)
    norm = jnp.sqrt(jnp.sum(logits * logits, axis=1, keepdims=True))
    return logits / jnp.maximum(norm, 1e-12)                   # L2 normalize


# --------------------------------- parameters ----------------------------------

def _xavier(key, shape, gain=1.414):
    fan_in, fan_out = shape[0], shape[1]
    std = gain * (2.0 / (fan_in + fan_out)) ** 0.5
    return std * jax.random.normal(key, shape, jnp.float32)


def init_params(key, cfg):
    in_dims, nh = cfg["in_dims"], cfg["num_hidden"]
    edge_dim, num_etypes = cfg["edge_dim"], cfg["num_etypes"]
    heads, num_classes = cfg["heads"], cfg["num_classes"]
    keys = iter(jax.random.split(key, 128))

    params = {
        "fc_list": [(_xavier(next(keys), (d, nh)),
                     jnp.zeros((nh,), jnp.float32)) for d in in_dims],
        "fc_res_w": _xavier(next(keys), (nh, nh)),
        "fc_res_b": jnp.zeros((nh,), jnp.float32),
        "layers": [],
    }

    def make_layer(in_feats, out_feats, num_heads, residual):
        lp = {
            "heads": num_heads,
            "out_feats": out_feats,
            "edge_dim": edge_dim,
            "residual": residual,
            "W": _xavier(next(keys), (in_feats, num_heads * out_feats)),
            "W_e": _xavier(next(keys), (edge_dim, num_heads * edge_dim)),
            "edge_emb": 0.1 * jax.random.normal(next(keys), (num_etypes, edge_dim),
                                                jnp.float32),
            "attn_l": _xavier(next(keys), (num_heads, out_feats)),
            "attn_r": _xavier(next(keys), (num_heads, out_feats)),
            "attn_e": _xavier(next(keys), (num_heads, edge_dim)),
            "W_res": None,
        }
        if residual and in_feats != num_heads * out_feats:
            lp["W_res"] = _xavier(next(keys), (in_feats, num_heads * out_feats))
        return lp

    # layer 0: in = 2*nh, out = 2*nh, no residual
    params["layers"].append(make_layer(2 * nh, 2 * nh, heads[0], residual=False))
    # middle layers
    for l in range(1, cfg["num_layers"]):
        params["layers"].append(
            make_layer(2 * nh * heads[l - 1], 2 * nh, heads[l], residual=True))
    # output layer
    params["layers"].append(
        make_layer(2 * nh * heads[-2], num_classes, heads[-1], residual=True))
    return params


# ------------------------------------ main --------------------------------------

if __name__ == "__main__":
    cfg = {
        "in_dims": [12, 16, 20],        # 3 node types
        "node_counts": [12, 10, 10],    # N = 32 nodes total
        "num_hidden": 16,               # 2*num_hidden = 32
        "num_classes": 5,
        "num_layers": 2,
        "heads": [2, 2, 1],
        "edge_dim": 8,
        "num_etypes": 4,
        "negative_slope": 0.2,
        "alpha": 0.05,
        "tile_rows": 16,                # 2 dst tiles -> exercises the tiled grid path
        "agg_bf16": False,              # opt-in bf16 aggregation matmul (v6e/v7x)
        "attn_dtype": "bfloat16",       # bf16 attn / res_attn round-trip between layers
    }
    N = sum(cfg["node_counts"])

    key = jax.random.PRNGKey(0)
    k_feat, k_adj, k_et, k_par = jax.random.split(key, 4)

    feat_keys = jax.random.split(k_feat, len(cfg["in_dims"]))
    features_list = [
        jax.random.normal(fk, (n, d), jnp.float32)
        for fk, n, d in zip(feat_keys, cfg["node_counts"], cfg["in_dims"])
    ]

    # dense graph: adj[dst, src] with self-loops; edge types per (dst, src)
    adj = jax.random.bernoulli(k_adj, 0.3, (N, N)).astype(jnp.float32)
    adj = jnp.maximum(adj, jnp.eye(N, dtype=jnp.float32))
    etype_dense = jax.random.randint(k_et, (N, N), 0, cfg["num_etypes"], jnp.int32)
    etype_dense = jnp.where(jnp.eye(N, dtype=bool),
                            cfg["num_etypes"] - 1, etype_dense)  # self-loop etype

    params = init_params(k_par, cfg)

    logits = mygat1_forward(params, features_list, adj, etype_dense, cfg)
    jax.block_until_ready(logits)
    assert logits.shape == (N, cfg["num_classes"])
    assert bool(jnp.all(jnp.isfinite(logits)))
    print("KERNEL_OK")
</pallas_src>

<mosaic_0001>
module attributes {stable_mosaic.version = 11 : i64} {
  func.func @_transform_kernel(%arg0: i32, %arg1: memref<32x32xf32, #tpu.memory_space<vmem>>, %arg2: memref<32x64xf32, #tpu.memory_space<vmem>>, %arg3: memref<64x4xf32, #tpu.memory_space<vmem>>, %arg4: memref<32x64xf32, #tpu.memory_space<vmem>>, %arg5: memref<32x4xf32, #tpu.memory_space<vmem>>) attributes {dimension_semantics = [#tpu.dimension_semantics<parallel>], iteration_bounds = array<i64: 1>, scalar_prefetch = 0 : i64, scratch_operands = 0 : i64, tpu.core_type = #tpu.core_type<tc>, window_params = [{transform_indices = @transform_0, window_bounds = array<i64: 32, 32>}, {pipeline_mode = #tpu.pipeline_mode<synchronous>, transform_indices = @transform_1, window_bounds = array<i64: 32, 64>}, {pipeline_mode = #tpu.pipeline_mode<synchronous>, transform_indices = @transform_2, window_bounds = array<i64: 64, 4>}, {transform_indices = @transform_3, window_bounds = array<i64: 32, 64>}, {transform_indices = @transform_4, window_bounds = array<i64: 32, 4>}]} {
    %c0 = arith.constant 0 : index
    %c0_0 = arith.constant 0 : index
    %0 = vector.load %arg1[%c0, %c0_0] : memref<32x32xf32, #tpu.memory_space<vmem>>, vector<32x32xf32>
    %c0_1 = arith.constant 0 : index
    %c0_2 = arith.constant 0 : index
    %1 = vector.load %arg2[%c0_1, %c0_2] : memref<32x64xf32, #tpu.memory_space<vmem>>, vector<32x64xf32>
    %cst = arith.constant dense<0.000000e+00> : vector<32x64xf32>
    %2 = tpu.matmul %0, %1, %cst {dimension_numbers = #tpu.dot_dimension_numbers<[1], [0], [0], [1], [0, 0, 1, 1], [], []>} : vector<32x32xf32>, vector<32x64xf32>, vector<32x64xf32> -> vector<32x64xf32>
    %c0_3 = arith.constant 0 : index
    %c0_4 = arith.constant 0 : index
    %3 = vector.load %arg4[%c0_3, %c0_4] : memref<32x64xf32, #tpu.memory_space<vmem>>, vector<32x64xf32>
    tpu.vector_store %arg4[%c0_3, %c0_4], %2 {strides = array<i32>} : memref<32x64xf32, #tpu.memory_space<vmem>>, vector<32x64xf32>,
    %c0_5 = arith.constant 0 : index
    %c0_6 = arith.constant 0 : index
    %4 = vector.load %arg3[%c0_5, %c0_6] : memref<64x4xf32, #tpu.memory_space<vmem>>, vector<64x4xf32>
    %cst_7 = arith.constant dense<0.000000e+00> : vector<32x4xf32>
    %5 = tpu.matmul %2, %4, %cst_7 {dimension_numbers = #tpu.dot_dimension_numbers<[1], [0], [0], [1], [0, 0, 1, 1], [], []>} : vector<32x64xf32>, vector<64x4xf32>, vector<32x4xf32> -> vector<32x4xf32>
    %c0_8 = arith.constant 0 : index
    %c0_9 = arith.constant 0 : index
    %6 = vector.load %arg5[%c0_8, %c0_9] : memref<32x4xf32, #tpu.memory_space<vmem>>, vector<32x4xf32>
    tpu.vector_store %arg5[%c0_8, %c0_9], %5 {strides = array<i32>} : memref<32x4xf32, #tpu.memory_space<vmem>>, vector<32x4xf32>,
    return
  }
  func.func @transform_0(%arg0: i32) -> (i32, i32) {
    %c0_i32 = arith.constant 0 : i32
    %c0_i32_0 = arith.constant 0 : i32
    return %arg0, %c0_i32 : i32, i32
  }
  func.func @transform_1(%arg0: i32) -> (i32, i32) {
    %c0_i32 = arith.constant 0 : i32
    %c0_i32_0 = arith.constant 0 : i32
    %c0_i32_1 = arith.constant 0 : i32
    return %c0_i32, %c0_i32_0 : i32, i32
  }
  func.func @transform_2(%arg0: i32) -> (i32, i32) {
    %c0_i32 = arith.constant 0 : i32
    %c0_i32_0 = arith.constant 0 : i32
    %c0_i32_1 = arith.constant 0 : i32
    return %c0_i32, %c0_i32_0 : i32, i32
  }
  func.func @transform_3(%arg0: i32) -> (i32, i32) {
    %c0_i32 = arith.constant 0 : i32
    %c0_i32_0 = arith.constant 0 : i32
    return %arg0, %c0_i32 : i32, i32
  }
  func.func @transform_4(%arg0: i32) -> (i32, i32) {
    %c0_i32 = arith.constant 0 : i32
    %c0_i32_0 = arith.constant 0 : i32
    return %arg0, %c0_i32 : i32, i32
  }
}

</mosaic_0001>

<llo_original>
// kernel: tpu_custom_call.1
$region0: #{tpu_custom_call.1}
  #allocation0 [shape = 'u32[]', space=smem, size = 0x4, offset = 0x4, fixed_abs, tag = 'smem constant byte address 0x4 - core index']
  #allocation1 [shape = 'u32[144,128]{1,0:T(1,128)}', space=vmem, size = 0x12000, scoped, tag = 'internal scratch']
  %s0 = inlined_call_operand.vmem [shape: f32[32,32], index: 0, kind: input, shape index: {}]
  %s1 = inlined_call_operand.vmem [shape: f32[32,64], index: 1, kind: input, shape index: {}]
  %s2 = inlined_call_operand.vmem [shape: f32[64,4], index: 2, kind: input, shape index: {}]
  %s3 = inlined_call_operand.hbm [shape: f32[32,64], index: 3, kind: output, shape index: {0}]
  %s4 = inlined_call_operand.vmem [shape: f32[32,4], index: 4, kind: output, shape index: {1}]
  %5 = xla_tuple %s3, %s4
  %s6 = sld [smem:[#allocation0]]
  $region30: #{tpu_custom_call.1} parent=0
    _
  %s8 = ssub.s32 1, %s6
  %s9 = scalar_select 0, %s8, %s6
  $region1: #{tpu_custom_call.1} parent=0
    #allocation2 [shape = 'u8[16384]{0}', space=vmem, size = 0x4000, scoped, tag = 'output window, operand 0, single buffered']
    #allocation3 [shape = 's32[1]{0}', space=sflag, size = 0x4, scoped, tag = 'scoped memory for tpu_custom_call.1']
    %10 = vsyncpa [#allocation3], 0
    // Predicated region
    $region2: #{tpu_custom_call.1} parent=1 // pred_check
      _
    $region3: #{tpu_custom_call.1} parent=1 // pred_check_branch
      %12 = sbr.rel (0) target = $region5
    $region4: #{tpu_custom_call.1} parent=1 // pred_region
      _
    $region5: #{tpu_custom_call.1} parent=1 // pred_fallthru
      _
    // Predicated region
    $region6: #{tpu_custom_call.1} parent=1 // pred_check
      _
    $region7: #{tpu_custom_call.1} parent=1 // pred_check_branch
      %14 = sbr.rel (0) target = $region9
    $region8: #{tpu_custom_call.1} parent=1 // pred_region
      _
    $region9: #{tpu_custom_call.1} parent=1 // pred_fallthru
      _
    // Predicated region
    $region10: #{tpu_custom_call.1} parent=1 // pred_check
      _
    $region11: #{tpu_custom_call.1} parent=1 // pred_check_branch
      %16 = sbr.rel (0) target = $region13
    $region12: #{tpu_custom_call.1} parent=1 // pred_region
      _
    $region13: #{tpu_custom_call.1} parent=1 // pred_fallthru
      _
    %v17 = vld [vmem:[%s0] sm:$0xff]
    %v18 = vld [vmem:[%s0 + $0x8] sm:$0xff]
    %v19 = vld [vmem:[%s0 + $0x10] sm:$0xff]
    %v20 = vld [vmem:[%s0 + $0x18] sm:$0xff]
    %v21 = vld [vmem:[%s1] sm:$0xff]
    %v22 = vld [vmem:[%s1 + $0x8] sm:$0xff]
    %v23 = vld [vmem:[%s1 + $0x10] sm:$0xff]
    %v24 = vld [vmem:[%s1 + $0x18] sm:$0xff]
    %vm25 = vcmask 261120
    %v27 = vsel %vm25, %v17, 0
    %v30 = vsel %vm25, %v18, 0
    %v33 = vsel %vm25, %v19, 0
    %v36 = vsel %vm25, %v20, 0
    %38 = vmatprep.subr.mxu0 0.0
    %39 = vmatpush1.msra.mxu0 %v21
    %40 = vmatprep.subr.mxu0 0.0
    %41 = vmatpush1.msra.mxu0 %v22
    %42 = vmatprep.subr.mxu0 0.0
    %43 = vmatpush1.msra.mxu0 %v23
    %44 = vmatprep.subr.mxu0 0.0
    %45 = vmatpush1.msra.mxu0 %v24
    %46 = vmatprep.subr.mxu0 0.0
    %47 = vmatpush1.msra.mxu0 0.0
    %48 = vmatprep.subr.mxu0 0.0
    %49 = vmatpush1.msra.mxu0 0.0
    %50 = vmatprep.subr.mxu0 0.0
    %51 = vmatpush1.msra.mxu0 0.0
    %52 = vmatprep.subr.mxu0 0.0
    %53 = vmatpush1.msra.mxu0 0.0
    %54 = vmatprep.subr.mxu0 0.0
    %55 = vmatpush1.msra.mxu0 0.0
    %56 = vmatprep.subr.mxu0 0.0
    %57 = vmatpush1.msra.mxu0 0.0
    %58 = vmatprep.subr.mxu0 0.0
    %59 = vmatpush1.msra.mxu0 0.0
    %60 = vmatprep.subr.mxu0 0.0
    %61 = vmatpush1.msra.mxu0 0.0
    %62 = vmatprep.subr.mxu0 0.0
    %63 = vmatpush1.msra.mxu0 0.0
    %64 = vmatprep.subr.mxu0 0.0
    %65 = vmatpush1.msra.mxu0 0.0
    %66 = vmatprep.subr.mxu0 0.0
    %67 = vmatpush1.msra.mxu0 0.0
    %68 = vmatprep.subr.mxu0 0.0
    %69 = vmatpush1.msra.mxu0 0.0
    %70 = vmatprep.subr.mxu0 0.0
    %71 = vmatpush1.msra.mxu0 0.0
    %72 = vmatprep.subr.mxu0 0.0
    %73 = vmatpush1.msra.mxu0 0.0
    %74 = vmatprep.subr.mxu0 0.0
    %75 = vmatpush1.msra.mxu0 0.0
    %76 = vmatprep.subr.mxu0 0.0
    %77 = vmatpush1.msra.mxu0 0.0
    %78 = vmatprep.subr.mxu0 0.0
    %79 = vmatpush1.msra.mxu0 0.0
    %80 = vmatprep.subr.mxu0 0.0
    %81 = vmatpush1.msra.mxu0 0.0
    %82 = vmatprep.subr.mxu0 0.0
    %83 = vmatpush1.msra.mxu0 0.0
    %84 = vmatprep.subr.mxu0 0.0
    %85 = vmatpush1.msra.mxu0 0.0
    %86 = vmatprep.subr.mxu0 0.0
    %87 = vmatpush1.msra.mxu0 0.0
    %88 = vmatprep.subr.mxu0 0.0
    %89 = vmatpush1.msra.mxu0 0.0
    %90 = vmatprep.subr.mxu0 0.0
    %91 = vmatpush1.msra.mxu0 0.0
    %92 = vmatprep.subr.mxu0 0.0
    %93 = vmatpush1.msra.mxu0 0.0
    %94 = vmatprep.subr.mxu0 0.0
    %95 = vmatpush1.msra.mxu0 0.0
    %96 = vmatprep.subr.mxu0 0.0
    %97 = vmatpush1.msra.mxu0 0.0
    %98 = vmatprep.subr.mxu0 0.0
    %99 = vmatpush1.msra.mxu0 0.0
    %100 = vmatprep.subr.mxu0 0.0
    %101 = vmatpush1.msra.mxu0 0.0
    %102 = vmatprep.mubr.f32.mxu0 0.0
    %103 = vmatmul.mubr.f32.gmra.mrb[0].mxu0 %v27
    %v104 = vpop.f32.mrb[0].mxu0
    %v105 = vadd.f32 0.0, %v104
    %v106 = vpop.f32.mrb[0].mxu0
    %107 = vmatprep.mubr.f32.mxu0 0.0
    %108 = vmatmul.mubr.f32.gmra.mrb[0].mxu0 %v30
    %v109 = vpop.f32.mrb[0].mxu0
    %v110 = vadd.f32 0.0, %v109
    %v111 = vpop.f32.mrb[0].mxu0
    %112 = vmatprep.mubr.f32.mxu0 0.0
    %113 = vmatmul.mubr.f32.gmra.mrb[0].mxu0 %v33
    %v114 = vpop.f32.mrb[0].mxu0
    %v115 = vadd.f32 0.0, %v114
    %v116 = vpop.f32.mrb[0].mxu0
    %117 = vmatprep.mubr.f32.mxu0 0.0
    %118 = vmatmul.mubr.f32.gmra.mrb[0].mxu0 %v36
    %v119 = vpop.f32.mrb[0].mxu0
    %v120 = vadd.f32 0.0, %v119
    %v121 = vpop.f32.mrb[0].mxu0
    %122 = vdwg.mxu0
    %vm123 = vcmask 523264
    %124 = vst.msk [vmem:[#allocation2] sm:$0xff] %vm123, %v105
    %125 = vst.msk [vmem:[#allocation2 + $0x8] sm:$0xff] %vm123, %v110
    %126 = vst.msk [vmem:[#allocation2 + $0x10] sm:$0xff] %vm123, %v115
    %127 = vst.msk [vmem:[#allocation2 + $0x18] sm:$0xff] %vm123, %v120
    %v128 = vld [vmem:[%s2] sm:$0xff]
    %v129 = vld [vmem:[%s2 + $0x8] sm:$0xff]
    %v130 = vld [vmem:[%s2 + $0x10] sm:$0xff]
    %v131 = vld [vmem:[%s2 + $0x18] sm:$0xff]
    %v132 = vld [vmem:[%s2 + $0x20] sm:$0xff]
    %v133 = vld [vmem:[%s2 + $0x28] sm:$0xff]
    %v134 = vld [vmem:[%s2 + $0x30] sm:$0xff]
    %v135 = vld [vmem:[%s2 + $0x38] sm:$0xff]
    %v137 = vsel %vm123, %v105, 0
    %v140 = vsel %vm123, %v110, 0
    %v143 = vsel %vm123, %v115, 0
    %v146 = vsel %vm123, %v120, 0
    %148 = vmatprep.subr.mxu0 0.0
    %149 = vmatpush1.msra.mxu0 %v128
    %150 = vmatprep.subr.mxu0 0.0
    %151 = vmatpush1.msra.mxu0 %v129
    %152 = vmatprep.subr.mxu0 0.0
    %153 = vmatpush1.msra.mxu0 %v130
    %154 = vmatprep.subr.mxu0 0.0
    %155 = vmatpush1.msra.mxu0 %v131
    %156 = vmatprep.subr.mxu0 0.0
    %157 = vmatpush1.msra.mxu0 %v132
    %158 = vmatprep.subr.mxu0 0.0
    %159 = vmatpush1.msra.mxu0 %v133
    %160 = vmatprep.subr.mxu0 0.0
    %161 = vmatpush1.msra.mxu0 %v134
    %162 = vmatprep.subr.mxu0 0.0
    %163 = vmatpush1.msra.mxu0 %v135
    %164 = vmatprep.subr.mxu0 0.0
    %165 = vmatpush1.msra.mxu0 0.0
    %166 = vmatprep.subr.mxu0 0.0
    %167 = vmatpush1.msra.mxu0 0.0
    %168 = vmatprep.subr.mxu0 0.0
    %169 = vmatpush1.msra.mxu0 0.0
    %170 = vmatprep.subr.mxu0 0.0
    %171 = vmatpush1.msra.mxu0 0.0
    %172 = vmatprep.subr.mxu0 0.0
    %173 = vmatpush1.msra.mxu0 0.0
    %174 = vmatprep.subr.mxu0 0.0
    %175 = vmatpush1.msra.mxu0 0.0
    %176 = vmatprep.subr.mxu0 0.0
    %177 = vmatpush1.msra.mxu0 0.0
    %178 = vmatprep.subr.mxu0 0.0
    %179 = vmatpush1.msra.mxu0 0.0
    %180 = vmatprep.subr.mxu0 0.0
    %181 = vmatpush1.msra.mxu0 0.0
    %182 = vmatprep.subr.mxu0 0.0
    %183 = vmatpush1.msra.mxu0 0.0
    %184 = vmatprep.subr.mxu0 0.0
    %185 = vmatpush1.msra.mxu0 0.0
    %186 = vmatprep.subr.mxu0 0.0
    %187 = vmatpush1.msra.mxu0 0.0
    %188 = vmatprep.subr.mxu0 0.0
    %189 = vmatpush1.msra.mxu0 0.0
    %190 = vmatprep.subr.mxu0 0.0
    %191 = vmatpush1.msra.mxu0 0.0
    %192 = vmatprep.subr.mxu0 0.0
    %193 = vmatpush1.msra.mxu0 0.0
    %194 = vmatprep.subr.mxu0 0.0
    %195 = vmatpush1.msra.mxu0 0.0
    %196 = vmatprep.subr.mxu0 0.0
    %197 = vmatpush1.msra.mxu0 0.0
    %198 = vmatprep.subr.mxu0 0.0
    %199 = vmatpush1.msra.mxu0 0.0
    %200 = vmatprep.subr.mxu0 0.0
    %201 = vmatpush1.msra.mxu0 0.0
    %202 = vmatprep.subr.mxu0 0.0
    %203 = vmatpush1.msra.mxu0 0.0
    %204 = vmatprep.subr.mxu0 0.0
    %205 = vmatpush1.msra.mxu0 0.0
    %206 = vmatprep.subr.mxu0 0.0
    %207 = vmatpush1.msra.mxu0 0.0
    %208 = vmatprep.subr.mxu0 0.0
    %209 = vmatpush1.msra.mxu0 0.0
    %210 = vmatprep.subr.mxu0 0.0
    %211 = vmatpush1.msra.mxu0 0.0
    %212 = vmatprep.mubr.f32.mxu0 0.0
    %213 = vmatmul.mubr.f32.gmra.mrb[0].mxu0 %v137
    %v214 = vpop.f32.mrb[0].mxu0
    %v215 = vadd.f32 0.0, %v214
    %v216 = vpop.f32.mrb[0].mxu0
    %217 = vmatprep.mubr.f32.mxu0 0.0
    %218 = vmatmul.mubr.f32.gmra.mrb[0].mxu0 %v140
    %v219 = vpop.f32.mrb[0].mxu0
    %v220 = vadd.f32 0.0, %v219
    %v221 = vpop.f32.mrb[0].mxu0
    %222 = vmatprep.mubr.f32.mxu0 0.0
    %223 = vmatmul.mubr.f32.gmra.mrb[0].mxu0 %v143
    %v224 = vpop.f32.mrb[0].mxu0
    %v225 = vadd.f32 0.0, %v224
    %v226 = vpop.f32.mrb[0].mxu0
    %227 = vmatprep.mubr.f32.mxu0 0.0
    %228 = vmatmul.mubr.f32.gmra.mrb[0].mxu0 %v146
    %v229 = vpop.f32.mrb[0].mxu0
    %v230 = vadd.f32 0.0, %v229
    %v231 = vpop.f32.mrb[0].mxu0
    %232 = vdwg.mxu0
    %vm233 = vcmask 31744
    %234 = vst.msk [vmem:[%s4] sm:$0xff] %vm233, %v215
    %235 = vst.msk [vmem:[%s4 + $0x8] sm:$0xff] %vm233, %v220
    %236 = vst.msk [vmem:[%s4 + $0x10] sm:$0xff] %vm233, %v225
    %237 = vst.msk [vmem:[%s4 + $0x18] sm:$0xff] %vm233, %v230
    // Predicated region
    $region14: #{tpu_custom_call.1} parent=1 // pred_check
      _
    $region15: #{tpu_custom_call.1} parent=1 // pred_check_branch
      %239 = sbr.rel (0) target = $region17
    $region16: #{tpu_custom_call.1} parent=1 // pred_region
      %s241 = ssub.s32 512, 512
      %242 = vsyncadd [#allocation3], %s241
      %s243 = sshll.u32 [#allocation2], 4
      %s244 = int_to_ptr.vmem [resolvable:$true] %s243
      %249 = dma.vmem_to_hbm [thread:$0]  %s244, 512, %s3, [#allocation3], 128, 128, 8
    $region17: #{tpu_custom_call.1} parent=1 // pred_fallthru
      _
    // Predicated region
    $region18: #{tpu_custom_call.1} parent=1 // pred_check
      _
    $region19: #{tpu_custom_call.1} parent=1 // pred_check_branch
      %251 = sbr.rel (0) target = $region21
    $region20: #{tpu_custom_call.1} parent=1 // pred_region
      _
    $region21: #{tpu_custom_call.1} parent=1 // pred_fallthru
      _
    // Predicated region
    $region22: #{tpu_custom_call.1} parent=1 // pred_check
      _
    $region23: #{tpu_custom_call.1} parent=1 // pred_check_branch
      %253 = sbr.rel (0) target = $region25
    $region24: #{tpu_custom_call.1} parent=1 // pred_region
      %254 = dma.done [#allocation3], 512
    $region25: #{tpu_custom_call.1} parent=1 // pred_fallthru
      _
    // Predicated region
    $region26: #{tpu_custom_call.1} parent=1 // pred_check
      _
    $region27: #{tpu_custom_call.1} parent=1 // pred_check_branch
      %256 = sbr.rel (0) target = $region29
    $region28: #{tpu_custom_call.1} parent=1 // pred_region
      _
    $region29: #{tpu_custom_call.1} parent=1 // pred_fallthru
      _
    %257 = vsyncpa [#allocation3], 1

</llo_original>
